<compile_context>
chip_gen: v6e
topology: v6e:2x2x1
jax: 0.10.0
libtpu: 0.0.40
codegen_flags: <defaults>
</compile_context>

<pallas_src>
import functools

import jax
import jax.numpy as jnp
from jax.experimental import pallas as pl
from jax.experimental.pallas import tpu as pltpu


def _round_up(x, m):
    return ((x + m - 1) // m) * m


def _cdiv(a, b):
    return -(-a // b)


def _kernel_resident(x_ref, w_ref, b_ref, o_ref, *, mxu_dtype):
    # x_ref: (tm, Hp) row tile; w_ref: (Hp, Hp) pre-transposed weight (in, out) layout;
    # b_ref: (1, Hp).  out = x + x @ Wt + b; f32 accumulate on the MXU, f32 residual+bias.
    x = x_ref[...]
    y = jnp.dot(x.astype(mxu_dtype), w_ref[...], preferred_element_type=jnp.float32)
    o_ref[...] = (x.astype(jnp.float32) + y
                  + b_ref[...].astype(jnp.float32)).astype(o_ref.dtype)


def _kernel_streamed(x_ref, w_ref, b_ref, o_ref, *, mxu_dtype):
    # x_ref: (tm, Hp) row tile; w_ref: (Hp, tn) column strip of (W.T + I) -- the residual
    # is folded into the weight so x is read only once and no second operand is needed;
    # b_ref: (1, tn) bias slice.
    y = jnp.dot(x_ref[...].astype(mxu_dtype), w_ref[...],
                preferred_element_type=jnp.float32)
    o_ref[...] = (y + b_ref[...].astype(jnp.float32)).astype(o_ref.dtype)


def _vmem_capacity_bytes():
    try:
        cap = getattr(pltpu.get_tpu_info(), "vmem_capacity_bytes", None)
        if cap:
            return int(cap)
    except Exception:
        pass
    return 64 << 20  # conservative (v7x per-TensorCore) fallback


def skip_connection_linear(x, w, b, *, tile_m=512, compute_dtype="auto",
                           force_streamed=False):
    """x: (B, S, H); w: (H, H) torch nn.Linear weight (out, in); b: (H,).
    Returns x + x @ w.T + b."""
    B, S, H = x.shape
    assert w.shape == (H, H) and b.shape == (H,)
    M = B * S
    Hp = _round_up(H, 128)                       # lane-dense last dim
    xbytes = x.dtype.itemsize

    if compute_dtype == "auto":
        # bf16 MXU inputs (f32 accumulate) when activations are f32: v6e/v7x MXUs are
        # bf16-native and it halves weight HBM/VMEM traffic.  Residual/bias stay f32.
        mxu_dtype = jnp.bfloat16 if x.dtype == jnp.float32 else x.dtype
    elif compute_dtype is None:
        mxu_dtype = x.dtype
    else:
        mxu_dtype = jnp.dtype(compute_dtype)
    wbytes = jnp.dtype(mxu_dtype).itemsize

    # Generation-aware VMEM budgets (v5e/v6e: 128 MiB physical; v7x: 64 MiB per TC).
    vmem_cap = _vmem_capacity_bytes()
    if vmem_cap >= (96 << 20):
        weight_budget, xtile_budget, vmem_hard_cap = 72 << 20, 24 << 20, 110 << 20
    else:
        weight_budget, xtile_budget, vmem_hard_cap = 30 << 20, 12 << 20, 58 << 20

    # Row tile: as large as the rows allow (sublane granularity 8), capped by tile_m and
    # a double-buffered x-tile budget.  No row padding: the grid uses cdiv and the ragged
    # boundary block only produces garbage in rows that are never written back.
    tm = min(int(tile_m), _round_up(M, 8))
    while tm > 128 and 2 * tm * Hp * xbytes > xtile_budget:
        tm //= 2
    tm = max(8, _round_up(tm, 8))
    if M > 256 and _cdiv(M, tm) < 2:             # keep >=2 row blocks so both TCs stay busy
        tm = max(128, _round_up(_cdiv(M, 2), 8))
    row_blocks = _cdiv(M, tm)

    # Pad hidden only (lane density); padded columns are zeros and sliced off at the end.
    x2 = x.reshape(M, H)
    if Hp != H:
        x2 = jnp.pad(x2, ((0, 0), (0, Hp - H)))
    wpad = w if Hp == H else jnp.pad(w, ((0, Hp - H), (0, Hp - H)))
    bp = (b if Hp == H else jnp.pad(b, (0, Hp - H))).reshape(1, Hp)

    # Resident if the (double-buffered) full weight fits the budget.
    # TODO(synk): single-buffer the constant-index weight (pipeline_mode=pl.Buffered(1))
    # once verified on the target jax version; that would ~double the resident-H range.
    resident = (not force_streamed) and (2 * Hp * Hp * wbytes <= weight_budget)

    cost = pl.CostEstimate(
        flops=2 * M * H * H, transcendentals=0,
        bytes_accessed=2 * M * H * xbytes + H * H * wbytes + H * b.dtype.itemsize)

    if resident:
        # Path A: full pre-transposed weight resident in VMEM, 1-D grid over row tiles.
        wt = wpad.T.astype(mxu_dtype)                      # one-time (in, out) transpose
        grid = (row_blocks,)
        kernel = functools.partial(_kernel_resident, mxu_dtype=mxu_dtype)
        in_specs = [
            pl.BlockSpec((tm, Hp), lambda i: (i, 0)),      # x row tile (streams)
            pl.BlockSpec((Hp, Hp), lambda i: (0, 0)),      # weight (constant index -> one fetch per core)
            pl.BlockSpec((1, Hp), lambda i: (0, 0)),       # bias
        ]
        out_specs = pl.BlockSpec((tm, Hp), lambda i: (i, 0))
        dims = ("parallel",)
        vmem_est = (2 * tm * Hp * xbytes                   # x (double-buffered)
                    + 2 * Hp * Hp * wbytes                 # weight (pipeline double buffer)
                    + 2 * Hp * bp.dtype.itemsize           # bias
                    + 2 * tm * Hp * xbytes)                # out (double-buffered)
    else:
        # Path B: weight too big to keep resident -> tile output columns and fold the
        # residual into the weight: out = x @ (W.T + I) + b, so x is read from HBM once.
        # TODO(synk): add a K-tiled 3-D grid (i, j, k) with a VMEM f32 accumulator for
        # very large H (f32 H >= ~12k on v7x) where full-K strips throttle tm/tn.
        wt = (wpad.T + jnp.eye(Hp, dtype=wpad.dtype)).astype(mxu_dtype)

        if force_streamed:                                  # test hook: force tn=128
            weight_budget = min(weight_budget, 2 * Hp * 128 * wbytes)

        # tn: multiple-of-128 divisor of Hp whose double-buffered strip fits the budget;
        # prefer a multiple of 256 (v6e/v7x MXU is 2x256^2).
        k = Hp // 128
        best, best_even = 1, None
        for cand in range(1, k + 1):
            if k % cand:
                continue
            if 2 * Hp * (128 * cand) * wbytes <= weight_budget:
                best = cand
                if cand % 2 == 0:
                    best_even = cand
        d = best_even if (best_even is not None and best_even >= best // 2) else best
        tn = 128 * d
        col_blocks = Hp // tn

        # Loop-order selection: re-stream whichever operand costs less HBM traffic.
        traffic_rows_outer = row_blocks * Hp * Hp * wbytes + M * Hp * xbytes
        traffic_cols_outer = Hp * Hp * wbytes + col_blocks * M * Hp * xbytes
        rows_outer = traffic_rows_outer <= traffic_cols_outer

        kernel = functools.partial(_kernel_streamed, mxu_dtype=mxu_dtype)
        if rows_outer:
            # x row tile resident across the inner column axis; W strips re-streamed.
            grid = (row_blocks, col_blocks)
            in_specs = [
                pl.BlockSpec((tm, Hp), lambda i, j: (i, 0)),
                pl.BlockSpec((Hp, tn), lambda i, j: (0, j)),
                pl.BlockSpec((1, tn), lambda i, j: (0, j)),
            ]
            out_specs = pl.BlockSpec((tm, tn), lambda i, j: (i, j))
        else:
            # Few rows / huge hidden: W strip resident across the inner row axis;
            # x row tiles re-streamed (W read from HBM exactly once).
            grid = (col_blocks, row_blocks)
            in_specs = [
                pl.BlockSpec((tm, Hp), lambda j, i: (i, 0)),
                pl.BlockSpec((Hp, tn), lambda j, i: (0, j)),
                pl.BlockSpec((1, tn), lambda j, i: (0, j)),
            ]
            out_specs = pl.BlockSpec((tm, tn), lambda j, i: (i, j))
        dims = ("parallel", "arbitrary")
        vmem_est = (2 * tm * Hp * xbytes
                    + 2 * Hp * tn * wbytes
                    + 2 * tn * bp.dtype.itemsize
                    + 2 * tm * tn * xbytes)

    vmem_limit = min(int(vmem_est * 1.3) + (4 << 20), vmem_hard_cap)

    out2 = pl.pallas_call(
        kernel,
        out_shape=jax.ShapeDtypeStruct((M, Hp), x.dtype),
        grid_spec=pltpu.PrefetchScalarGridSpec(
            num_scalar_prefetch=0,
            grid=grid,
            in_specs=in_specs,
            out_specs=out_specs,
        ),
        compiler_params=pltpu.CompilerParams(
            dimension_semantics=dims,
            vmem_limit_bytes=vmem_limit),
        cost_estimate=cost,
    )(x2, wt, bp)

    if Hp != H:
        out2 = out2[:, :H]
    return out2.reshape(B, S, H)


if __name__ == "__main__":
    key = jax.random.PRNGKey(0)
    kx, kw, kb = jax.random.split(key, 3)

    batch, seq, hidden = 2, 8, 32

    x = jax.random.normal(kx, (batch, seq, hidden), dtype=jnp.float32)
    # Deterministic parameter init (PyTorch-Linear-like uniform bounds).
    bound = 1.0 / (hidden ** 0.5)
    w = jax.random.uniform(kw, (hidden, hidden), jnp.float32, -bound, bound)
    b = jax.random.uniform(kb, (hidden,), jnp.float32, -bound, bound)

    ref = x + jnp.einsum("bsh,oh->bso", x, w) + b

    # 1) Exact f32 MXU compute (resident-weight path) -> bitwise-tight check.
    out_f32 = jax.block_until_ready(skip_connection_linear(x, w, b, compute_dtype=jnp.float32))
    assert jnp.allclose(out_f32, ref, atol=1e-5, rtol=1e-5), "f32 resident path mismatch"

    # 2) Default path: bf16 MXU inputs, f32 accumulate (the v6e/v7x fast path).
    out_bf16 = jax.block_until_ready(skip_connection_linear(x, w, b))
    assert jnp.allclose(out_bf16, ref, atol=5e-2, rtol=5e-2), "bf16 default path mismatch"

    # 3) Streamed-weight path (forced, f32 compute) with a larger hidden size.
    hidden2 = 256
    kx2, kw2, kb2 = jax.random.split(jax.random.PRNGKey(1), 3)
    x2 = jax.random.normal(kx2, (batch, seq, hidden2), dtype=jnp.float32)
    bound2 = 1.0 / (hidden2 ** 0.5)
    w2 = jax.random.uniform(kw2, (hidden2, hidden2), jnp.float32, -bound2, bound2)
    b2 = jax.random.uniform(kb2, (hidden2,), jnp.float32, -bound2, bound2)
    ref2 = x2 + jnp.einsum("bsh,oh->bso", x2, w2) + b2
    out2 = jax.block_until_ready(
        skip_connection_linear(x2, w2, b2, compute_dtype=jnp.float32, force_streamed=True))
    assert jnp.allclose(out2, ref2, atol=1e-5, rtol=1e-5), "f32 streamed path mismatch"

    print("KERNEL_OK")
</pallas_src>

<mosaic_0001>
module attributes {stable_mosaic.version = 11 : i64} {
  func.func @_kernel_resident(%arg0: i32, %arg1: memref<16x128xf32, #tpu.memory_space<vmem>>, %arg2: memref<128x128xf32, #tpu.memory_space<vmem>>, %arg3: memref<1x128xf32, #tpu.memory_space<vmem>>, %arg4: memref<16x128xf32, #tpu.memory_space<vmem>>) attributes {dimension_semantics = [#tpu.dimension_semantics<parallel>], iteration_bounds = array<i64: 1>, scalar_prefetch = 0 : i64, scratch_operands = 0 : i64, tpu.core_type = #tpu.core_type<tc>, window_params = [{transform_indices = @transform_0, window_bounds = array<i64: 16, 128>}, {pipeline_mode = #tpu.pipeline_mode<synchronous>, transform_indices = @transform_1, window_bounds = array<i64: 128, 128>}, {pipeline_mode = #tpu.pipeline_mode<synchronous>, transform_indices = @transform_2, window_bounds = array<i64: 1, 128>}, {transform_indices = @transform_3, window_bounds = array<i64: 16, 128>}]} {
    %c0 = arith.constant 0 : index
    %c0_0 = arith.constant 0 : index
    %0 = vector.load %arg1[%c0, %c0_0] : memref<16x128xf32, #tpu.memory_space<vmem>>, vector<16x128xf32>
    %c0_1 = arith.constant 0 : index
    %c0_2 = arith.constant 0 : index
    %1 = vector.load %arg2[%c0_1, %c0_2] : memref<128x128xf32, #tpu.memory_space<vmem>>, vector<128x128xf32>
    %cst = arith.constant dense<0.000000e+00> : vector<16x128xf32>
    %2 = tpu.matmul %0, %1, %cst {dimension_numbers = #tpu.dot_dimension_numbers<[1], [0], [0], [1], [0, 0, 1, 1], [], []>} : vector<16x128xf32>, vector<128x128xf32>, vector<16x128xf32> -> vector<16x128xf32>
    %3 = arith.addf %0, %2 : vector<16x128xf32>
    %c0_3 = arith.constant 0 : index
    %c0_4 = arith.constant 0 : index
    %4 = vector.load %arg3[%c0_3, %c0_4] : memref<1x128xf32, #tpu.memory_space<vmem>>, vector<1x128xf32>
    %5 = vector.broadcast %4 : vector<1x128xf32> to vector<16x128xf32>
    %6 = arith.addf %3, %5 : vector<16x128xf32>
    %c0_5 = arith.constant 0 : index
    %c0_6 = arith.constant 0 : index
    %7 = vector.load %arg4[%c0_5, %c0_6] : memref<16x128xf32, #tpu.memory_space<vmem>>, vector<16x128xf32>
    tpu.vector_store %arg4[%c0_5, %c0_6], %6 {strides = array<i32>} : memref<16x128xf32, #tpu.memory_space<vmem>>, vector<16x128xf32>,
    return
  }
  func.func @transform_0(%arg0: i32) -> (i32, i32) {
    %c0_i32 = arith.constant 0 : i32
    %c0_i32_0 = arith.constant 0 : i32
    return %arg0, %c0_i32 : i32, i32
  }
  func.func @transform_1(%arg0: i32) -> (i32, i32) {
    %c0_i32 = arith.constant 0 : i32
    %c0_i32_0 = arith.constant 0 : i32
    %c0_i32_1 = arith.constant 0 : i32
    return %c0_i32, %c0_i32_0 : i32, i32
  }
  func.func @transform_2(%arg0: i32) -> (i32, i32) {
    %c0_i32 = arith.constant 0 : i32
    %c0_i32_0 = arith.constant 0 : i32
    %c0_i32_1 = arith.constant 0 : i32
    return %c0_i32, %c0_i32_0 : i32, i32
  }
  func.func @transform_3(%arg0: i32) -> (i32, i32) {
    %c0_i32 = arith.constant 0 : i32
    %c0_i32_0 = arith.constant 0 : i32
    return %arg0, %c0_i32 : i32, i32
  }
}

</mosaic_0001>

<llo_original>
// kernel: tpu_custom_call.1
$region0: #{tpu_custom_call.1}
  #allocation0 [shape = 'u32[]', space=smem, size = 0x4, offset = 0x4, fixed_abs, tag = 'smem constant byte address 0x4 - core index']
  #allocation1 [shape = 'u32[144,128]{1,0:T(1,128)}', space=vmem, size = 0x12000, scoped, tag = 'internal scratch']
  %s0 = inlined_call_operand.hbm [shape: f32[16,128], index: 0, kind: input, shape index: {}]
  %s1 = inlined_call_operand.hbm [shape: f32[128,128], index: 1, kind: input, shape index: {}]
  %s2 = inlined_call_operand.vmem [shape: f32[1,128], index: 2, kind: input, shape index: {}]
  %s3 = inlined_call_operand.hbm [shape: f32[16,128], index: 3, kind: output, shape index: {}]
  %s4 = sld [smem:[#allocation0]]
  $region30: #{tpu_custom_call.1} parent=0
    _
  %s6 = ssub.s32 1, %s4
  %s7 = scalar_select 0, %s6, %s4
  $region1: #{tpu_custom_call.1} parent=0
    #allocation2 [shape = 'u8[8192]{0}', space=vmem, size = 0x2000, scoped, tag = 'input window, operand 0, single buffered']
    #allocation3 [shape = 's32[1]{0}', space=sflag, size = 0x4, scoped, tag = 'scoped memory for tpu_custom_call.1']
    #allocation4 [shape = 's32[1]{0}', space=sflag, size = 0x4, scoped, tag = 'scoped memory for tpu_custom_call.1']
    #allocation5 [shape = 'u8[65536]{0}', space=vmem, size = 0x10000, scoped, tag = 'input window, operand 1, single buffered']
    #allocation6 [shape = 's32[1]{0}', space=sflag, size = 0x4, scoped, tag = 'scoped memory for tpu_custom_call.1']
    #allocation7 [shape = 'u8[8192]{0}', space=vmem, size = 0x2000, scoped, tag = 'output window, operand 0, single buffered']
    %8 = vsyncpa [#allocation3], 0
    %9 = vsyncpa [#allocation6], 0
    %10 = vsyncpa [#allocation4], 0
    // Predicated region
    $region2: #{tpu_custom_call.1} parent=1 // pred_check
      _
    $region3: #{tpu_custom_call.1} parent=1 // pred_check_branch
      %12 = sbr.rel (0) target = $region5
    $region4: #{tpu_custom_call.1} parent=1 // pred_region
      %s14 = ssub.s32 256, 256
      %15 = vsyncadd [#allocation3], %s14
      %s16 = sshll.u32 [#allocation2], 4
      %s17 = int_to_ptr.vmem [resolvable:$true] %s16
      %22 = dma.hbm_to_vmem [thread:$0]  %s0, 256, %s17, [#allocation3], 128, 128, 8
    $region5: #{tpu_custom_call.1} parent=1 // pred_fallthru
      _
    // Predicated region
    $region6: #{tpu_custom_call.1} parent=1 // pred_check
      _
    $region7: #{tpu_custom_call.1} parent=1 // pred_check_branch
      %24 = sbr.rel (0) target = $region9
    $region8: #{tpu_custom_call.1} parent=1 // pred_region
      %s26 = ssub.s32 2048, 2048
      %27 = vsyncadd [#allocation6], %s26
      %s28 = sshll.u32 [#allocation5], 4
      %s29 = int_to_ptr.vmem [resolvable:$true] %s28
      %34 = dma.hbm_to_vmem [thread:$0]  %s1, 2048, %s29, [#allocation6], 128, 128, 8
    $region9: #{tpu_custom_call.1} parent=1 // pred_fallthru
      _
    // Predicated region
    $region10: #{tpu_custom_call.1} parent=1 // pred_check
      _
    $region11: #{tpu_custom_call.1} parent=1 // pred_check_branch
      %36 = sbr.rel (0) target = $region13
    $region12: #{tpu_custom_call.1} parent=1 // pred_region
      _
    $region13: #{tpu_custom_call.1} parent=1 // pred_fallthru
      _
    // Predicated region
    $region14: #{tpu_custom_call.1} parent=1 // pred_check
      _
    $region15: #{tpu_custom_call.1} parent=1 // pred_check_branch
      %38 = sbr.rel (0) target = $region17
    $region16: #{tpu_custom_call.1} parent=1 // pred_region
      %39 = dma.done [#allocation3], 256
    $region17: #{tpu_custom_call.1} parent=1 // pred_fallthru
      _
    // Predicated region
    $region18: #{tpu_custom_call.1} parent=1 // pred_check
      _
    $region19: #{tpu_custom_call.1} parent=1 // pred_check_branch
      %41 = sbr.rel (0) target = $region21
    $region20: #{tpu_custom_call.1} parent=1 // pred_region
      %42 = dma.done [#allocation6], 2048
    $region21: #{tpu_custom_call.1} parent=1 // pred_fallthru
      _
    %v43 = vld [vmem:[#allocation2] sm:$0xff]
    %v44 = vld [vmem:[#allocation2 + $0x8] sm:$0xff]
    %v45 = vld [vmem:[#allocation5] sm:$0xff]
    %v46 = vld [vmem:[#allocation5 + $0x8] sm:$0xff]
    %v47 = vld [vmem:[#allocation5 + $0x10] sm:$0xff]
    %v48 = vld [vmem:[#allocation5 + $0x18] sm:$0xff]
    %v49 = vld [vmem:[#allocation5 + $0x20] sm:$0xff]
    %v50 = vld [vmem:[#allocation5 + $0x28] sm:$0xff]
    %v51 = vld [vmem:[#allocation5 + $0x30] sm:$0xff]
    %v52 = vld [vmem:[#allocation5 + $0x38] sm:$0xff]
    %v53 = vld [vmem:[#allocation5 + $0x40] sm:$0xff]
    %v54 = vld [vmem:[#allocation5 + $0x48] sm:$0xff]
    %v55 = vld [vmem:[#allocation5 + $0x50] sm:$0xff]
    %v56 = vld [vmem:[#allocation5 + $0x58] sm:$0xff]
    %v57 = vld [vmem:[#allocation5 + $0x60] sm:$0xff]
    %v58 = vld [vmem:[#allocation5 + $0x68] sm:$0xff]
    %v59 = vld [vmem:[#allocation5 + $0x70] sm:$0xff]
    %v60 = vld [vmem:[#allocation5 + $0x78] sm:$0xff]
    %61 = vmatprep.subr.mxu0 0.0
    %62 = vmatpush1.msra.mxu0 %v60
    %63 = vmatprep.subr.mxu0 0.0
    %64 = vmatpush1.msra.mxu0 %v59
    %65 = vmatprep.subr.mxu0 0.0
    %66 = vmatpush1.msra.mxu0 %v58
    %67 = vmatprep.subr.mxu0 0.0
    %68 = vmatpush1.msra.mxu0 %v57
    %69 = vmatprep.subr.mxu0 0.0
    %70 = vmatpush1.msra.mxu0 %v56
    %71 = vmatprep.subr.mxu0 0.0
    %72 = vmatpush1.msra.mxu0 %v55
    %73 = vmatprep.subr.mxu0 0.0
    %74 = vmatpush1.msra.mxu0 %v54
    %75 = vmatprep.subr.mxu0 0.0
    %76 = vmatpush1.msra.mxu0 %v53
    %77 = vmatprep.subr.mxu0 0.0
    %78 = vmatpush1.msra.mxu0 %v52
    %79 = vmatprep.subr.mxu0 0.0
    %80 = vmatpush1.msra.mxu0 %v51
    %81 = vmatprep.subr.mxu0 0.0
    %82 = vmatpush1.msra.mxu0 %v50
    %83 = vmatprep.subr.mxu0 0.0
    %84 = vmatpush1.msra.mxu0 %v49
    %85 = vmatprep.subr.mxu0 0.0
    %86 = vmatpush1.msra.mxu0 %v48
    %87 = vmatprep.subr.mxu0 0.0
    %88 = vmatpush1.msra.mxu0 %v47
    %89 = vmatprep.subr.mxu0 0.0
    %90 = vmatpush1.msra.mxu0 %v46
    %91 = vmatprep.subr.mxu0 0.0
    %92 = vmatpush1.msra.mxu0 %v45
    %93 = vmatprep.subr.mxu0 0.0
    %94 = vmatpush2.msra.mxu0 0.0
    %95 = vmatprep.subr.mxu0 0.0
    %96 = vmatpush2.msra.mxu0 0.0
    %97 = vmatprep.subr.mxu0 0.0
    %98 = vmatpush2.msra.mxu0 0.0
    %99 = vmatprep.subr.mxu0 0.0
    %100 = vmatpush2.msra.mxu0 0.0
    %101 = vmatprep.subr.mxu0 0.0
    %102 = vmatpush2.msra.mxu0 0.0
    %103 = vmatprep.subr.mxu0 0.0
    %104 = vmatpush2.msra.mxu0 0.0
    %105 = vmatprep.subr.mxu0 0.0
    %106 = vmatpush2.msra.mxu0 0.0
    %107 = vmatprep.subr.mxu0 0.0
    %108 = vmatpush2.msra.mxu0 0.0
    %109 = vmatprep.subr.mxu0 0.0
    %110 = vmatpush2.msra.mxu0 0.0
    %111 = vmatprep.subr.mxu0 0.0
    %112 = vmatpush2.msra.mxu0 0.0
    %113 = vmatprep.subr.mxu0 0.0
    %114 = vmatpush2.msra.mxu0 0.0
    %115 = vmatprep.subr.mxu0 0.0
    %116 = vmatpush2.msra.mxu0 0.0
    %117 = vmatprep.subr.mxu0 0.0
    %118 = vmatpush2.msra.mxu0 0.0
    %119 = vmatprep.subr.mxu0 0.0
    %120 = vmatpush2.msra.mxu0 0.0
    %121 = vmatprep.subr.mxu0 0.0
    %122 = vmatpush2.msra.mxu0 0.0
    %123 = vmatprep.subr.mxu0 0.0
    %124 = vmatpush2.msra.mxu0 0.0
    %125 = vmatprep.mubr.f32.mxu0 0.0
    %126 = vmatmul.mubr.f32.gmra.mxu0 %v43
    %v127 = vpop.f32.mrf.mxu0
    %v128 = vadd.f32 0.0, %v127
    %v129 = vpop.f32.mrf.mxu0
    %130 = vmatprep.mubr.f32.mxu0 0.0
    %131 = vmatmul.mubr.f32.gmra.mxu0 %v44
    %v132 = vpop.f32.mrf.mxu0
    %v133 = vadd.f32 0.0, %v132
    %v134 = vpop.f32.mrf.mxu0
    %135 = vdwg.mxu0
    %v136 = vadd.f32 %v43, %v128
    %v137 = vadd.f32 %v44, %v133
    %v138 = vld [vmem:[%s2] sm:$0x1]
    %v140 = vlaneseq
    %v141 = vshrl.u32 %v140, 7
    %v142 = vsub.s32 0, %v141
    %v143 = vrot.slane %v138, %v142
    %v145 = vadd.f32 %v136, %v143
    %v146 = vadd.f32 %v137, %v143
    %147 = vst [vmem:[#allocation7] sm:$0xff] %v145
    %148 = vst [vmem:[#allocation7 + $0x8] sm:$0xff] %v146
    // Predicated region
    $region22: #{tpu_custom_call.1} parent=1 // pred_check
      _
    $region23: #{tpu_custom_call.1} parent=1 // pred_check_branch
      %150 = sbr.rel (0) target = $region25
    $region24: #{tpu_custom_call.1} parent=1 // pred_region
      %s152 = ssub.s32 256, 256
      %153 = vsyncadd [#allocation4], %s152
      %s154 = sshll.u32 [#allocation7], 4
      %s155 = int_to_ptr.vmem [resolvable:$true] %s154
      %160 = dma.vmem_to_hbm [thread:$0]  %s155, 256, %s3, [#allocation4], 128, 128, 8
    $region25: #{tpu_custom_call.1} parent=1 // pred_fallthru
      _
    // Predicated region
    $region26: #{tpu_custom_call.1} parent=1 // pred_check
      _
    $region27: #{tpu_custom_call.1} parent=1 // pred_check_branch
      %162 = sbr.rel (0) target = $region29
    $region28: #{tpu_custom_call.1} parent=1 // pred_region
      %163 = dma.done [#allocation4], 256
    $region29: #{tpu_custom_call.1} parent=1 // pred_fallthru
      _
    %164 = vsyncpa [#allocation3], 1
    %165 = vsyncpa [#allocation6], 1
    %166 = vsyncpa [#allocation4], 1

</llo_original>
